<compile_context>
chip_gen: v7x
topology: tpu7x:2x2x1
jax: 0.10.0
libtpu: 0.0.40
codegen_flags: <defaults>
</compile_context>

<pallas_src>
import functools

import jax
import jax.numpy as jnp
from jax.experimental import pallas as pl
from jax.experimental.pallas import tpu as pltpu


def _round_up(x, m):
    return ((x + m - 1) // m) * m


def _convblock_kernel(x_ref, mask_ref, w1_ref, b1_ref, a1_ref,
                      w2_ref, b2_ref, a2_ref, o_ref, *, Wp, G, P_out):
    # x_ref    : (1, Cin, L)   bf16  zero-extended, flattened, spatially padded input
    # mask_ref : (1, P_out)    f32   1.0 on valid interior pixels, 0.0 on conv padding / tail
    # w*_ref   : (Cout, 9*C)   bf16  im2col-reshaped conv weights
    # b*_ref, a*_ref : (Cout, 1) f32 bias / PReLU slope (broadcast over lanes)
    # o_ref    : (1, Cout, P_out) f32 output in padded-flat coordinates (lane-dense)
    cout = o_ref.shape[1]
    L = x_ref.shape[2]
    offs = [(ky - 1) * Wp + (kx - 1) for ky in range(3) for kx in range(3)]

    x = x_ref[0]                       # (Cin, L) bf16
    mask = mask_ref[...]               # (1, P_out) f32

    # ---- conv1: im2col (9 static lane slices stacked on sublanes) + one MXU matmul
    xs = jnp.concatenate([x[:, G + d:G + d + P_out] for d in offs], axis=0)   # (9*Cin, P_out)
    y1 = jnp.dot(w1_ref[...], xs, preferred_element_type=jnp.float32)         # (Cout, P_out)
    y1 = y1 + b1_ref[...]
    h1 = jnp.where(y1 > 0, y1, a1_ref[...] * y1)                              # PReLU (f32)

    # zero the conv-padding border / tail (this IS conv2's zero padding), cast for MXU
    h1 = (h1 * mask).astype(jnp.bfloat16)

    # extend with zero margins so conv2's taps are again plain static slices
    h1e = jnp.concatenate(
        [jnp.zeros((cout, G), jnp.bfloat16), h1,
         jnp.zeros((cout, L - G - P_out), jnp.bfloat16)], axis=1)             # (Cout, L)

    # ---- conv2: same im2col + single matmul
    hs = jnp.concatenate([h1e[:, G + d:G + d + P_out] for d in offs], axis=0)  # (9*Cout, P_out)
    y2 = jnp.dot(w2_ref[...], hs, preferred_element_type=jnp.float32)
    y2 = y2 + b2_ref[...]
    o_ref[0] = jnp.where(y2 > 0, y2, a2_ref[...] * y2)


def conv_block_forward(x_nchw, w1_oihw, b1, a1, w2_oihw, b2, a2):
    """ConvBlock forward. x_nchw: (N, Cin, H, W) f32 -> (N, Cout, H, W) f32."""
    N, Cin, H, W = x_nchw.shape
    Cout = w1_oihw.shape[0]
    Hp, Wp = H + 2, W + 2
    P = Hp * Wp                        # flattened padded-image length
    P_out = _round_up(P, 128)          # lane-dense matmul / output width
    G = Wp + 1                         # largest |tap offset| in flat coordinates
    L = _round_up(P_out + 2 * G, 128)  # extended input width (zero margins both sides)

    # input: NCHW -> spatial zero pad -> flatten -> zero-extend -> bf16
    x_pad = jnp.pad(x_nchw, ((0, 0), (0, 0), (1, 1), (1, 1)))
    x_ext = jnp.pad(x_pad.reshape(N, Cin, P), ((0, 0), (0, 0), (G, L - G - P)))
    x_ext = x_ext.astype(jnp.bfloat16)

    # weights: OIHW -> (Cout, ky, kx, Cin) -> (Cout, 9*Cin), matching tap stacking order
    w1m = jnp.transpose(w1_oihw, (0, 2, 3, 1)).reshape(Cout, 9 * Cin).astype(jnp.bfloat16)
    w2m = jnp.transpose(w2_oihw, (0, 2, 3, 1)).reshape(Cout, 9 * Cout).astype(jnp.bfloat16)
    b1r = b1.reshape(Cout, 1).astype(jnp.float32)
    b2r = b2.reshape(Cout, 1).astype(jnp.float32)
    a1r = a1.reshape(Cout, 1).astype(jnp.float32)
    a2r = a2.reshape(Cout, 1).astype(jnp.float32)

    # interior-pixel mask in padded-flat coordinates (computed once, outside the kernel)
    pos = jnp.arange(P_out)
    row, col = pos // Wp, pos % Wp
    mask = ((pos < P) & (row >= 1) & (row <= H) & (col >= 1) & (col <= W))
    mask = mask.astype(jnp.float32)[None, :]

    kernel = functools.partial(_convblock_kernel, Wp=Wp, G=G, P_out=P_out)
    full2d = lambda arr: pl.BlockSpec(arr.shape, lambda n: (0, 0))

    # TODO(synk): for large H*W, add an H-tile grid axis (row tiles + 2-row halo); at
    # these shapes one image is only a few vregs so a single tile per batch is optimal.
    out_flat = pl.pallas_call(
        kernel,
        out_shape=jax.ShapeDtypeStruct((N, Cout, P_out), jnp.float32),
        grid_spec=pltpu.PrefetchScalarGridSpec(
            num_scalar_prefetch=0,
            grid=(N,),
            in_specs=[
                pl.BlockSpec((1, Cin, L), lambda n: (n, 0, 0)),
                full2d(mask),
                full2d(w1m), full2d(b1r), full2d(a1r),
                full2d(w2m), full2d(b2r), full2d(a2r),
            ],
            out_specs=pl.BlockSpec((1, Cout, P_out), lambda n: (n, 0, 0)),
        ),
        compiler_params=pltpu.CompilerParams(
            dimension_semantics=("parallel",),
            vmem_limit_bytes=32 * 1024 * 1024),
    )(x_ext, mask, w1m, b1r, a1r, w2m, b2r, a2r)

    # padded-flat (N, Cout, P_out) -> interior crop -> NCHW; pure layout plumbing in XLA
    out = out_flat[:, :, :P].reshape(N, Cout, Hp, Wp)[:, :, 1:H + 1, 1:W + 1]
    return out


def reference_forward(x_nchw, w1_oihw, b1, a1, w2_oihw, b2, a2):
    """Pure-JAX f32 reference (mirrors the PyTorch forward)."""
    dn = jax.lax.conv_dimension_numbers(x_nchw.shape, w1_oihw.shape,
                                        ("NCHW", "OIHW", "NCHW"))
    y = jax.lax.conv_general_dilated(x_nchw, w1_oihw, (1, 1), "SAME",
                                     dimension_numbers=dn)
    y = y + b1[None, :, None, None]
    y = jnp.where(y > 0, y, a1[None, :, None, None] * y)
    y = jax.lax.conv_general_dilated(y, w2_oihw, (1, 1), "SAME",
                                     dimension_numbers=dn)
    y = y + b2[None, :, None, None]
    y = jnp.where(y > 0, y, a2[None, :, None, None] * y)
    return y


if __name__ == "__main__":
    # ConvBlock(in_dim=4, out_dim=8, depths=2), batch=2, spatial 16x16
    N, Cin, Cout, H, W = 2, 4, 8, 16, 16

    key = jax.random.PRNGKey(0)
    k_x, k_w1, k_b1, k_w2, k_b2 = jax.random.split(key, 5)

    x = jax.random.normal(k_x, (N, Cin, H, W), jnp.float32)
    w1 = jax.random.normal(k_w1, (Cout, Cin, 3, 3), jnp.float32) * 0.2
    b1 = jax.random.normal(k_b1, (Cout,), jnp.float32) * 0.1
    w2 = jax.random.normal(k_w2, (Cout, Cout, 3, 3), jnp.float32) * 0.2
    b2 = jax.random.normal(k_b2, (Cout,), jnp.float32) * 0.1
    # nn.PReLU(out_dim) initializes every per-channel slope to 0.25.
    a1 = jnp.full((Cout,), 0.25, jnp.float32)
    a2 = jnp.full((Cout,), 0.25, jnp.float32)

    out = conv_block_forward(x, w1, b1, a1, w2, b2, a2)
    out = jax.block_until_ready(out)

    ref = reference_forward(x, w1, b1, a1, w2, b2, a2)
    assert out.shape == (N, Cout, H, W)
    max_err = float(jnp.max(jnp.abs(out - ref)))
    # bf16 MXU operands -> slightly looser tolerance than pure f32
    assert jnp.allclose(out, ref, atol=5e-2, rtol=5e-2), f"mismatch vs reference (max abs err {max_err})"

    print("KERNEL_OK")
</pallas_src>

<mosaic_0001>
module attributes {stable_mosaic.version = 11 : i64} {
  func.func @_convblock_kernel(%arg0: i32, %arg1: memref<1x4x512xbf16, #tpu.memory_space<vmem>>, %arg2: memref<1x384xf32, #tpu.memory_space<vmem>>, %arg3: memref<8x36xbf16, #tpu.memory_space<vmem>>, %arg4: memref<8x1xf32, #tpu.memory_space<vmem>>, %arg5: memref<8x1xf32, #tpu.memory_space<vmem>>, %arg6: memref<8x72xbf16, #tpu.memory_space<vmem>>, %arg7: memref<8x1xf32, #tpu.memory_space<vmem>>, %arg8: memref<8x1xf32, #tpu.memory_space<vmem>>, %arg9: memref<1x8x384xf32, #tpu.memory_space<vmem>>) attributes {dimension_semantics = [#tpu.dimension_semantics<parallel>], iteration_bounds = array<i64: 2>, scalar_prefetch = 0 : i64, scratch_operands = 0 : i64, tpu.core_type = #tpu.core_type<tc>, window_params = [{transform_indices = @transform_0, window_bounds = array<i64: 1, 4, 512>}, {pipeline_mode = #tpu.pipeline_mode<synchronous>, transform_indices = @transform_1, window_bounds = array<i64: 1, 384>}, {pipeline_mode = #tpu.pipeline_mode<synchronous>, transform_indices = @transform_2, window_bounds = array<i64: 8, 36>}, {pipeline_mode = #tpu.pipeline_mode<synchronous>, transform_indices = @transform_3, window_bounds = array<i64: 8, 1>}, {pipeline_mode = #tpu.pipeline_mode<synchronous>, transform_indices = @transform_4, window_bounds = array<i64: 8, 1>}, {pipeline_mode = #tpu.pipeline_mode<synchronous>, transform_indices = @transform_5, window_bounds = array<i64: 8, 72>}, {pipeline_mode = #tpu.pipeline_mode<synchronous>, transform_indices = @transform_6, window_bounds = array<i64: 8, 1>}, {pipeline_mode = #tpu.pipeline_mode<synchronous>, transform_indices = @transform_7, window_bounds = array<i64: 8, 1>}, {transform_indices = @transform_8, window_bounds = array<i64: 1, 8, 384>}]} {
    %c0 = arith.constant 0 : index
    %c0_0 = arith.constant 0 : index
    %c0_1 = arith.constant 0 : index
    %0 = vector.load %arg1[%c0, %c0_0, %c0_1] : memref<1x4x512xbf16, #tpu.memory_space<vmem>>, vector<1x4x512xbf16>
    %1 = vector.shape_cast %0 : vector<1x4x512xbf16> to vector<4x512xbf16>
    %c0_2 = arith.constant 0 : index
    %c0_3 = arith.constant 0 : index
    %2 = vector.load %arg2[%c0_2, %c0_3] : memref<1x384xf32, #tpu.memory_space<vmem>>, vector<1x384xf32>
    %3 = vector.extract_strided_slice %1 {offsets = [0, 0], sizes = [4, 384], strides = [1, 1]} : vector<4x512xbf16> to vector<4x384xbf16>
    %4 = vector.extract_strided_slice %1 {offsets = [0, 1], sizes = [4, 384], strides = [1, 1]} : vector<4x512xbf16> to vector<4x384xbf16>
    %5 = vector.extract_strided_slice %1 {offsets = [0, 2], sizes = [4, 384], strides = [1, 1]} : vector<4x512xbf16> to vector<4x384xbf16>
    %6 = vector.extract_strided_slice %1 {offsets = [0, 18], sizes = [4, 384], strides = [1, 1]} : vector<4x512xbf16> to vector<4x384xbf16>
    %7 = vector.extract_strided_slice %1 {offsets = [0, 19], sizes = [4, 384], strides = [1, 1]} : vector<4x512xbf16> to vector<4x384xbf16>
    %8 = vector.extract_strided_slice %1 {offsets = [0, 20], sizes = [4, 384], strides = [1, 1]} : vector<4x512xbf16> to vector<4x384xbf16>
    %9 = vector.extract_strided_slice %1 {offsets = [0, 36], sizes = [4, 384], strides = [1, 1]} : vector<4x512xbf16> to vector<4x384xbf16>
    %10 = vector.extract_strided_slice %1 {offsets = [0, 37], sizes = [4, 384], strides = [1, 1]} : vector<4x512xbf16> to vector<4x384xbf16>
    %11 = vector.extract_strided_slice %1 {offsets = [0, 38], sizes = [4, 384], strides = [1, 1]} : vector<4x512xbf16> to vector<4x384xbf16>
    %12 = tpu.concatenate %3, %4, %5, %6, %7, %8, %9, %10, %11 in 0 : vector<4x384xbf16>, vector<4x384xbf16>, vector<4x384xbf16>, vector<4x384xbf16>, vector<4x384xbf16>, vector<4x384xbf16>, vector<4x384xbf16>, vector<4x384xbf16>, vector<4x384xbf16> -> vector<36x384xbf16>
    %c0_4 = arith.constant 0 : index
    %c0_5 = arith.constant 0 : index
    %13 = vector.load %arg3[%c0_4, %c0_5] : memref<8x36xbf16, #tpu.memory_space<vmem>>, vector<8x36xbf16>
    %cst = arith.constant dense<0.000000e+00> : vector<8x384xf32>
    %14 = tpu.matmul %13, %12, %cst {dimension_numbers = #tpu.dot_dimension_numbers<[1], [0], [0], [1], [0, 0, 1, 1], [], []>} : vector<8x36xbf16>, vector<36x384xbf16>, vector<8x384xf32> -> vector<8x384xf32>
    %c0_6 = arith.constant 0 : index
    %c0_7 = arith.constant 0 : index
    %15 = vector.load %arg4[%c0_6, %c0_7] : memref<8x1xf32, #tpu.memory_space<vmem>>, vector<8x1xf32>
    %16 = vector.broadcast %15 : vector<8x1xf32> to vector<8x384xf32>
    %17 = arith.addf %14, %16 : vector<8x384xf32>
    %cst_8 = arith.constant 0.000000e+00 : f32
    %18 = vector.broadcast %cst_8 : f32 to vector<8x384xf32>
    %19 = arith.cmpf ogt, %17, %18 : vector<8x384xf32>
    %c0_9 = arith.constant 0 : index
    %c0_10 = arith.constant 0 : index
    %20 = vector.load %arg5[%c0_9, %c0_10] : memref<8x1xf32, #tpu.memory_space<vmem>>, vector<8x1xf32>
    %21 = vector.broadcast %20 : vector<8x1xf32> to vector<8x384xf32>
    %22 = arith.mulf %21, %17 : vector<8x384xf32>
    %23 = arith.select %19, %17, %22 : vector<8x384xi1>, vector<8x384xf32>
    %24 = vector.broadcast %2 : vector<1x384xf32> to vector<8x384xf32>
    %25 = arith.mulf %23, %24 : vector<8x384xf32>
    %26 = arith.truncf %25 : vector<8x384xf32> to vector<8x384xbf16>
    %cst_11 = arith.constant 0.000000e+00 : bf16
    %27 = vector.broadcast %cst_11 : bf16 to vector<8x19xbf16>
    %cst_12 = arith.constant 0.000000e+00 : bf16
    %28 = vector.broadcast %cst_12 : bf16 to vector<8x109xbf16>
    %29 = tpu.concatenate %27, %26, %28 in 1 : vector<8x19xbf16>, vector<8x384xbf16>, vector<8x109xbf16> -> vector<8x512xbf16>
    %30 = vector.extract_strided_slice %29 {offsets = [0, 0], sizes = [8, 384], strides = [1, 1]} : vector<8x512xbf16> to vector<8x384xbf16>
    %31 = vector.extract_strided_slice %29 {offsets = [0, 1], sizes = [8, 384], strides = [1, 1]} : vector<8x512xbf16> to vector<8x384xbf16>
    %32 = vector.extract_strided_slice %29 {offsets = [0, 2], sizes = [8, 384], strides = [1, 1]} : vector<8x512xbf16> to vector<8x384xbf16>
    %33 = vector.extract_strided_slice %29 {offsets = [0, 18], sizes = [8, 384], strides = [1, 1]} : vector<8x512xbf16> to vector<8x384xbf16>
    %34 = vector.extract_strided_slice %29 {offsets = [0, 19], sizes = [8, 384], strides = [1, 1]} : vector<8x512xbf16> to vector<8x384xbf16>
    %35 = vector.extract_strided_slice %29 {offsets = [0, 20], sizes = [8, 384], strides = [1, 1]} : vector<8x512xbf16> to vector<8x384xbf16>
    %36 = vector.extract_strided_slice %29 {offsets = [0, 36], sizes = [8, 384], strides = [1, 1]} : vector<8x512xbf16> to vector<8x384xbf16>
    %37 = vector.extract_strided_slice %29 {offsets = [0, 37], sizes = [8, 384], strides = [1, 1]} : vector<8x512xbf16> to vector<8x384xbf16>
    %38 = vector.extract_strided_slice %29 {offsets = [0, 38], sizes = [8, 384], strides = [1, 1]} : vector<8x512xbf16> to vector<8x384xbf16>
    %39 = tpu.concatenate %30, %31, %32, %33, %34, %35, %36, %37, %38 in 0 : vector<8x384xbf16>, vector<8x384xbf16>, vector<8x384xbf16>, vector<8x384xbf16>, vector<8x384xbf16>, vector<8x384xbf16>, vector<8x384xbf16>, vector<8x384xbf16>, vector<8x384xbf16> -> vector<72x384xbf16>
    %c0_13 = arith.constant 0 : index
    %c0_14 = arith.constant 0 : index
    %40 = vector.load %arg6[%c0_13, %c0_14] : memref<8x72xbf16, #tpu.memory_space<vmem>>, vector<8x72xbf16>
    %cst_15 = arith.constant dense<0.000000e+00> : vector<8x384xf32>
    %41 = tpu.matmul %40, %39, %cst_15 {dimension_numbers = #tpu.dot_dimension_numbers<[1], [0], [0], [1], [0, 0, 1, 1], [], []>} : vector<8x72xbf16>, vector<72x384xbf16>, vector<8x384xf32> -> vector<8x384xf32>
    %c0_16 = arith.constant 0 : index
    %c0_17 = arith.constant 0 : index
    %42 = vector.load %arg7[%c0_16, %c0_17] : memref<8x1xf32, #tpu.memory_space<vmem>>, vector<8x1xf32>
    %43 = vector.broadcast %42 : vector<8x1xf32> to vector<8x384xf32>
    %44 = arith.addf %41, %43 : vector<8x384xf32>
    %cst_18 = arith.constant 0.000000e+00 : f32
    %45 = vector.broadcast %cst_18 : f32 to vector<8x384xf32>
    %46 = arith.cmpf ogt, %44, %45 : vector<8x384xf32>
    %c0_19 = arith.constant 0 : index
    %c0_20 = arith.constant 0 : index
    %47 = vector.load %arg8[%c0_19, %c0_20] : memref<8x1xf32, #tpu.memory_space<vmem>>, vector<8x1xf32>
    %48 = vector.broadcast %47 : vector<8x1xf32> to vector<8x384xf32>
    %49 = arith.mulf %48, %44 : vector<8x384xf32>
    %50 = arith.select %46, %44, %49 : vector<8x384xi1>, vector<8x384xf32>
    %c0_21 = arith.constant 0 : index
    %c0_22 = arith.constant 0 : index
    %c0_23 = arith.constant 0 : index
    %51 = vector.load %arg9[%c0_21, %c0_22, %c0_23] : memref<1x8x384xf32, #tpu.memory_space<vmem>>, vector<1x8x384xf32>
    %52 = vector.shape_cast %51 : vector<1x8x384xf32> to vector<8x384xf32>
    %53 = vector.shape_cast %50 : vector<8x384xf32> to vector<1x8x384xf32>
    tpu.vector_store %arg9[%c0_21, %c0_22, %c0_23], %53 {strides = array<i32>} : memref<1x8x384xf32, #tpu.memory_space<vmem>>, vector<1x8x384xf32>,
    return
  }
  func.func @transform_0(%arg0: i32) -> (i32, i32, i32) {
    %c0_i32 = arith.constant 0 : i32
    %c0_i32_0 = arith.constant 0 : i32
    %c0_i32_1 = arith.constant 0 : i32
    return %arg0, %c0_i32, %c0_i32_0 : i32, i32, i32
  }
  func.func @transform_1(%arg0: i32) -> (i32, i32) {
    %c0_i32 = arith.constant 0 : i32
    %c0_i32_0 = arith.constant 0 : i32
    %c0_i32_1 = arith.constant 0 : i32
    return %c0_i32, %c0_i32_0 : i32, i32
  }
  func.func @transform_2(%arg0: i32) -> (i32, i32) {
    %c0_i32 = arith.constant 0 : i32
    %c0_i32_0 = arith.constant 0 : i32
    %c0_i32_1 = arith.constant 0 : i32
    return %c0_i32, %c0_i32_0 : i32, i32
  }
  func.func @transform_3(%arg0: i32) -> (i32, i32) {
    %c0_i32 = arith.constant 0 : i32
    %c0_i32_0 = arith.constant 0 : i32
    %c0_i32_1 = arith.constant 0 : i32
    return %c0_i32, %c0_i32_0 : i32, i32
  }
  func.func @transform_4(%arg0: i32) -> (i32, i32) {
    %c0_i32 = arith.constant 0 : i32
    %c0_i32_0 = arith.constant 0 : i32
    %c0_i32_1 = arith.constant 0 : i32
    return %c0_i32, %c0_i32_0 : i32, i32
  }
  func.func @transform_5(%arg0: i32) -> (i32, i32) {
    %c0_i32 = arith.constant 0 : i32
    %c0_i32_0 = arith.constant 0 : i32
    %c0_i32_1 = arith.constant 0 : i32
    return %c0_i32, %c0_i32_0 : i32, i32
  }
  func.func @transform_6(%arg0: i32) -> (i32, i32) {
    %c0_i32 = arith.constant 0 : i32
    %c0_i32_0 = arith.constant 0 : i32
    %c0_i32_1 = arith.constant 0 : i32
    return %c0_i32, %c0_i32_0 : i32, i32
  }
  func.func @transform_7(%arg0: i32) -> (i32, i32) {
    %c0_i32 = arith.constant 0 : i32
    %c0_i32_0 = arith.constant 0 : i32
    %c0_i32_1 = arith.constant 0 : i32
    return %c0_i32, %c0_i32_0 : i32, i32
  }
  func.func @transform_8(%arg0: i32) -> (i32, i32, i32) {
    %c0_i32 = arith.constant 0 : i32
    %c0_i32_0 = arith.constant 0 : i32
    %c0_i32_1 = arith.constant 0 : i32
    return %arg0, %c0_i32, %c0_i32_0 : i32, i32, i32
  }
}

</mosaic_0001>

<llo_original>
// kernel: tpu_custom_call.1
$region0: #{tpu_custom_call.1}
  #allocation0 [shape = 'u32[]', space=smem, size = 0x4, offset = 0x4, fixed_abs, tag = 'smem constant byte address 0x4 - core index']
  #allocation1 [shape = 'u32[144,128]{1,0:T(1,128)}', space=vmem, size = 0x12000, scoped, tag = 'internal scratch']
  %s0 = inlined_call_operand.vmem [shape: bf16[2,4,512], index: 0, kind: input, shape index: {}]
  %s1 = inlined_call_operand.vmem [shape: f32[1,384], index: 1, kind: input, shape index: {}]
  %s2 = inlined_call_operand.vmem [shape: bf16[8,36], index: 2, kind: input, shape index: {}]
  %s3 = inlined_call_operand.vmem [shape: f32[8,1], index: 3, kind: input, shape index: {}]
  %s4 = inlined_call_operand.vmem [shape: f32[8,1], index: 4, kind: input, shape index: {}]
  %s5 = inlined_call_operand.vmem [shape: bf16[8,72], index: 5, kind: input, shape index: {}]
  %s6 = inlined_call_operand.vmem [shape: f32[8,1], index: 6, kind: input, shape index: {}]
  %s7 = inlined_call_operand.vmem [shape: f32[8,1], index: 7, kind: input, shape index: {}]
  %s8 = inlined_call_operand.hbm [shape: f32[2,8,384], index: 8, kind: output, shape index: {}]
  %s9 = sld [smem:[#allocation0]]
  $region65: #{tpu_custom_call.1} parent=0
    _
  %s11 = ssub.s32 1, %s9
  %s12 = scalar_select 0, %s11, %s9
  $region1: #{tpu_custom_call.1} parent=0
    #allocation2 [shape = 'u8[24576]{0}', space=vmem, size = 0x6000, scoped, tag = 'output window, operand 0']
    #allocation3 [shape = 's32[2]{0}', space=sflag, size = 0x8, scoped, tag = 'scoped memory for tpu_custom_call.1']
    %13 = vsyncpa [#allocation3], 0
    %s14 = scalar_lea.sflag [#allocation3], 1
    %15 = vsyncpa %s14, 0
    loop: start=0, step=1, limit=4
    $region2: #{tpu_custom_call.1} parent=1 // loop_pre_header
      _
    $region3: #{tpu_custom_call.1} parent=1 // loop_header
      %s17 = sphi 0, %s21
      %p18 = scmp.ge.s32.totalorder %s17, 4
      %s27 = sphi 0, %s29
      %s30 = sphi 0, %s27
      %s31 = sphi 0, %s30
      %s47 = sphi 0, %s31
      %s51 = sphi 0, %s51
      %s53 = sphi 0, %s51
      %s54 = sphi 0, %s53
      %s68 = sphi 0, %s54
      %s72 = sphi 0, %s72
      %s74 = sphi 0, %s72
      %s75 = sphi 0, %s74
      %s89 = sphi 0, %s75
      %s93 = sphi 0, %s93
      %s95 = sphi 0, %s93
      %s96 = sphi 0, %s95
      %s110 = sphi 0, %s96
      %s114 = sphi 0, %s114
      %s116 = sphi 0, %s114
      %s117 = sphi 0, %s116
      %s131 = sphi 0, %s117
      %s135 = sphi 0, %s135
      %s137 = sphi 0, %s135
      %s138 = sphi 0, %s137
      %s152 = sphi 0, %s138
      %s156 = sphi 0, %s156
      %s158 = sphi 0, %s156
      %s159 = sphi 0, %s158
      %s173 = sphi 0, %s159
      %s177 = sphi 0, %s177
      %s179 = sphi 0, %s177
      %s180 = sphi 0, %s179
      %s194 = sphi 0, %s180
      %s200 = sphi 0, %s202
      %s203 = sphi 0, %s200
      %s204 = sphi 0, %s203
      %s220 = sphi 0, %s204
    $region4: #{tpu_custom_call.1} parent=1 // loop_header_branch
      %20 = sbr.rel (%p18) target = $region8
    $region5: #{tpu_custom_call.1} parent=1 // loop_body
      %s22 = ssub.s32 %s17, 1
      %s23 = ssub.s32 %s17, 2
      %s24 = sadd.s32 %s17, 1
      %s25 = ssub.s32 %s17, %s24
      %p26 = scmp.eq.s32.totalorder %s25, 0
      %s28 = sadd.s32 %s27, 1
      %s29 = scalar_select %p26, %s27, %s28
      %p32 = pneg %p26
      %p33 = scmp.eq.s32.totalorder %s17, 1
      %p34 = por %p32, %p33
      %p35 = scmp.ne.s32.totalorder %s27, %s30
      %p36 = scmp.eq.s32.totalorder %s17, 0
      %p37 = por %p35, %p36
      %p38 = scmp.ne.s32.totalorder %s27, %s30
      %p39 = scmp.eq.s32.totalorder %s22, 1
      %p40 = por %p38, %p39
      %p41 = scmp.ne.s32.totalorder %s30, %s31
      %p42 = scmp.eq.s32.totalorder %s22, 0
      %p43 = por %p41, %p42
      %p44 = scmp.ne.s32.totalorder %s30, %s31
      %p45 = scmp.eq.s32.totalorder %s23, 1
      %p46 = por %p44, %p45
      %p48 = scmp.ne.s32.totalorder %s31, %s47
      %p49 = scmp.eq.s32.totalorder %s23, 0
      %p50 = por %p48, %p49
      %s52 = sadd.s32 %s51, 1
      %p55 = scmp.eq.s32.totalorder %s17, 1
      %p56 = scmp.ne.s32.totalorder %s51, %s53
      %p57 = scmp.eq.s32.totalorder %s17, 0
      %p58 = por %p56, %p57
      %p59 = scmp.ne.s32.totalorder %s51, %s53
      %p60 = scmp.eq.s32.totalorder %s22, 1
      %p61 = por %p59, %p60
      %p62 = scmp.ne.s32.totalorder %s53, %s54
      %p63 = scmp.eq.s32.totalorder %s22, 0
      %p64 = por %p62, %p63
      %p65 = scmp.ne.s32.totalorder %s53, %s54
      %p66 = scmp.eq.s32.totalorder %s23, 1
      %p67 = por %p65, %p66
      %p69 = scmp.ne.s32.totalorder %s54, %s68
      %p70 = scmp.eq.s32.totalorder %s23, 0
      %p71 = por %p69, %p70
      %s73 = sadd.s32 %s72, 1
      %p76 = scmp.eq.s32.totalorder %s17, 1
      %p77 = scmp.ne.s32.totalorder %s72, %s74
      %p78 = scmp.eq.s32.totalorder %s17, 0
      %p79 = por %p77, %p78
      %p80 = scmp.ne.s32.totalorder %s72, %s74
      %p81 = scmp.eq.s32.totalorder %s22, 1
      %p82 = por %p80, %p81
      %p83 = scmp.ne.s32.totalorder %s74, %s75
      %p84 = scmp.eq.s32.totalorder %s22, 0
      %p85 = por %p83, %p84
      %p86 = scmp.ne.s32.totalorder %s74, %s75
      %p87 = scmp.eq.s32.totalorder %s23, 1
      %p88 = por %p86, %p87
      %p90 = scmp.ne.s32.totalorder %s75, %s89
      %p91 = scmp.eq.s32.totalorder %s23, 0
      %p92 = por %p90, %p91
      %s94 = sadd.s32 %s93, 1
      %p97 = scmp.eq.s32.totalorder %s17, 1
      %p98 = scmp.ne.s32.totalorder %s93, %s95
      %p99 = scmp.eq.s32.totalorder %s17, 0
      %p100 = por %p98, %p99
      %p101 = scmp.ne.s32.totalorder %s93, %s95
      %p102 = scmp.eq.s32.totalorder %s22, 1
      %p103 = por %p101, %p102
      %p104 = scmp.ne.s32.totalorder %s95, %s96
      %p105 = scmp.eq.s32.totalorder %s22, 0
      %p106 = por %p104, %p105
      %p107 = scmp.ne.s32.totalorder %s95, %s96
      %p108 = scmp.eq.s32.totalorder %s23, 1
      %p109 = por %p107, %p108
      %p111 = scmp.ne.s32.totalorder %s96, %s110
      %p112 = scmp.eq.s32.totalorder %s23, 0
      %p113 = por %p111, %p112
      %s115 = sadd.s32 %s114, 1
      %p118 = scmp.eq.s32.totalorder %s17, 1
      %p119 = scmp.ne.s32.totalorder %s114, %s116
      %p120 = scmp.eq.s32.totalorder %s17, 0
      %p121 = por %p119, %p120
      %p122 = scmp.ne.s32.totalorder %s114, %s116
      %p123 = scmp.eq.s32.totalorder %s22, 1
      %p124 = por %p122, %p123
      %p125 = scmp.ne.s32.totalorder %s116, %s117
      %p126 = scmp.eq.s32.totalorder %s22, 0
      %p127 = por %p125, %p126
      %p128 = scmp.ne.s32.totalorder %s116, %s117
      %p129 = scmp.eq.s32.totalorder %s23, 1
      %p130 = por %p128, %p129
      %p132 = scmp.ne.s32.totalorder %s117, %s131
      %p133 = scmp.eq.s32.totalorder %s23, 0
      %p134 = por %p132, %p133
      %s136 = sadd.s32 %s135, 1
      %p139 = scmp.eq.s32.totalorder %s17, 1
      %p140 = scmp.ne.s32.totalorder %s135, %s137
      %p141 = scmp.eq.s32.totalorder %s17, 0
      %p142 = por %p140, %p141
      %p143 = scmp.ne.s32.totalorder %s135, %s137
      %p144 = scmp.eq.s32.totalorder %s22, 1
      %p145 = por %p143, %p144
      %p146 = scmp.ne.s32.totalorder %s137, %s138
      %p147 = scmp.eq.s32.totalorder %s22, 0
      %p148 = por %p146, %p147
      %p149 = scmp.ne.s32.totalorder %s137, %s138
      %p150 = scmp.eq.s32.totalorder %s23, 1
      %p151 = por %p149, %p150
      %p153 = scmp.ne.s32.totalorder %s138, %s152
      %p154 = scmp.eq.s32.totalorder %s23, 0
      %p155 = por %p153, %p154
      %s157 = sadd.s32 %s156, 1
      %p160 = scmp.eq.s32.totalorder %s17, 1
      %p161 = scmp.ne.s32.totalorder %s156, %s158
      %p162 = scmp.eq.s32.totalorder %s17, 0
      %p163 = por %p161, %p162
      %p164 = scmp.ne.s32.totalorder %s156, %s158
      %p165 = scmp.eq.s32.totalorder %s22, 1
      %p166 = por %p164, %p165
      %p167 = scmp.ne.s32.totalorder %s158, %s159
      %p168 = scmp.eq.s32.totalorder %s22, 0
      %p169 = por %p167, %p168
      %p170 = scmp.ne.s32.totalorder %s158, %s159
      %p171 = scmp.eq.s32.totalorder %s23, 1
      %p172 = por %p170, %p171
      %p174 = scmp.ne.s32.totalorder %s159, %s173
      %p175 = scmp.eq.s32.totalorder %s23, 0
      %p176 = por %p174, %p175
      %s178 = sadd.s32 %s177, 1
      %p181 = scmp.eq.s32.totalorder %s17, 1
      %p182 = scmp.ne.s32.totalorder %s177, %s179
      %p183 = scmp.eq.s32.totalorder %s17, 0
      %p184 = por %p182, %p183
      %p185 = scmp.ne.s32.totalorder %s177, %s179
      %p186 = scmp.eq.s32.totalorder %s22, 1
      %p187 = por %p185, %p186
      %p188 = scmp.ne.s32.totalorder %s179, %s180
      %p189 = scmp.eq.s32.totalorder %s22, 0
      %p190 = por %p188, %p189
      %p191 = scmp.ne.s32.totalorder %s179, %s180
      %p192 = scmp.eq.s32.totalorder %s23, 1
      %p193 = por %p191, %p192
      %p195 = scmp.ne.s32.totalorder %s180, %s194
      %p196 = scmp.eq.s32.totalorder %s23, 0
      %p197 = por %p195, %p196
      %s198 = ssub.s32 %s17, %s24
      %p199 = scmp.eq.s32.totalorder %s198, 0
      %s201 = sadd.s32 %s200, 1
      %s202 = scalar_select %p199, %s200, %s201
      %p205 = pneg %p199
      %p206 = scmp.eq.s32.totalorder %s17, 1
      %p207 = por %p205, %p206
      %p208 = scmp.ne.s32.totalorder %s200, %s203
      %p209 = scmp.eq.s32.totalorder %s17, 0
      %p210 = por %p208, %p209
      %p211 = scmp.ne.s32.totalorder %s200, %s203
      %p212 = scmp.eq.s32.totalorder %s22, 1
      %p213 = por %p211, %p212
      %p214 = scmp.ne.s32.totalorder %s203, %s204
      %p215 = scmp.eq.s32.totalorder %s22, 0
      %p216 = por %p214, %p215
      %p217 = scmp.ne.s32.totalorder %s203, %s204
      %p218 = scmp.eq.s32.totalorder %s23, 1
      %p219 = por %p217, %p218
      %p221 = scmp.ne.s32.totalorder %s204, %s220
      %p222 = scmp.eq.s32.totalorder %s23, 0
      %p223 = por %p221, %p222
      %p224 = scmp.le.s32.totalorder 1, %s17
      %p225 = scmp.lt.s32.totalorder %s17, 3
      %p226 = pnand %p224, %p225
      %p227 = pneg %p226
      // Predicated region
      $region9: #{tpu_custom_call.1} parent=5 // pred_check
        _
      $region10: #{tpu_custom_call.1} parent=5 // pred_check_branch
        %229 = sbr.rel (%p226) target = $region12
      $region11: #{tpu_custom_call.1} parent=5 // pred_region
        %s230 = ssub.s32 %s17, 1
        // Predicated region
        $region13: #{tpu_custom_call.1} parent=11 // pred_check
          %p231 = pneg %p64
        $region14: #{tpu_custom_call.1} parent=11 // pred_check_branch
          %233 = sbr.rel (%p231) target = $region16
        $region15: #{tpu_custom_call.1} parent=11 // pred_region
          _
        $region16: #{tpu_custom_call.1} parent=11 // pred_fallthru
          _
        // Predicated region
        $region17: #{tpu_custom_call.1} parent=11 // pred_check
          %p234 = pneg %p85
        $region18: #{tpu_custom_call.1} parent=11 // pred_check_branch
          %236 = sbr.rel (%p234) target = $region20
        $region19: #{tpu_custom_call.1} parent=11 // pred_region
          _
        $region20: #{tpu_custom_call.1} parent=11 // pred_fallthru
          _
        // Predicated region
        $region21: #{tpu_custom_call.1} parent=11 // pred_check
          %p237 = pneg %p106
        $region22: #{tpu_custom_call.1} parent=11 // pred_check_branch
          %239 = sbr.rel (%p237) target = $region24
        $region23: #{tpu_custom_call.1} parent=11 // pred_region
          _
        $region24: #{tpu_custom_call.1} parent=11 // pred_fallthru
          _
        // Predicated region
        $region25: #{tpu_custom_call.1} parent=11 // pred_check
          %p240 = pneg %p127
        $region26: #{tpu_custom_call.1} parent=11 // pred_check_branch
          %242 = sbr.rel (%p240) target = $region28
        $region27: #{tpu_custom_call.1} parent=11 // pred_region
          _
        $region28: #{tpu_custom_call.1} parent=11 // pred_fallthru
          _
        // Predicated region
        $region29: #{tpu_custom_call.1} parent=11 // pred_check
          %p243 = pneg %p148
        $region30: #{tpu_custom_call.1} parent=11 // pred_check_branch
          %245 = sbr.rel (%p243) target = $region32
        $region31: #{tpu_custom_call.1} parent=11 // pred_region
          _
        $region32: #{tpu_custom_call.1} parent=11 // pred_fallthru
          _
        // Predicated region
        $region33: #{tpu_custom_call.1} parent=11 // pred_check
          %p246 = pneg %p169
        $region34: #{tpu_custom_call.1} parent=11 // pred_check_branch
          %248 = sbr.rel (%p246) target = $region36
        $region35: #{tpu_custom_call.1} parent=11 // pred_region
          _
        $region36: #{tpu_custom_call.1} parent=11 // pred_fallthru
          _
        // Predicated region
        $region37: #{tpu_custom_call.1} parent=11 // pred_check
          %p249 = pneg %p190
        $region38: #{tpu_custom_call.1} parent=11 // pred_check_branch
          %251 = sbr.rel (%p249) target = $region40
        $region39: #{tpu_custom_call.1} parent=11 // pred_region
          _
        $region40: #{tpu_custom_call.1} parent=11 // pred_fallthru
          _
      $region12: #{tpu_custom_call.1} parent=5 // pred_fallthru
        _
      %p252 = scmp.lt.s32.totalorder %s17, 2
      // Predicated region
      $region41: #{tpu_custom_call.1} parent=5 // pred_check
        %p253 = pneg %p252
      $region42: #{tpu_custom_call.1} parent=5 // pred_check_branch
        %255 = sbr.rel (%p253) target = $region44
      $region43: #{tpu_custom_call.1} parent=5 // pred_region
        // Predicated region
        $region45: #{tpu_custom_call.1} parent=43 // pred_check
          %p256 = pneg %p37
        $region46: #{tpu_custom_call.1} parent=43 // pred_check_branch
          %258 = sbr.rel (%p256) target = $region48
        $region47: #{tpu_custom_call.1} parent=43 // pred_region
          %p259 = scmp.lt.s32.totalorder %s17, 1
          %s260 = scalar_select %p259, %s17, 1
          %s261 = smul.addr %s260, 4
          %s262 = smul.addr %s261, 2
          %s263 = scalar_lea.vmem %s0, %s262
        $region48: #{tpu_custom_call.1} parent=43 // pred_fallthru
          _
      $region44: #{tpu_custom_call.1} parent=5 // pred_fallthru
        _
      %p264 = scmp.le.s32.totalorder 1, %s17
      %p265 = scmp.lt.s32.totalorder %s17, 3
      %p266 = pnand %p264, %p265
      %p267 = pneg %p266
      // Predicated region
      $region49: #{tpu_custom_call.1} parent=5 // pred_check
        _
      $region50: #{tpu_custom_call.1} parent=5 // pred_check_branch
        %269 = sbr.rel (%p266) target = $region52
      $region51: #{tpu_custom_call.1} parent=5 // pred_region
        %s270 = ssub.s32 %s17, 1
        %p271 = scmp.lt.s32.totalorder %s22, 1
        %s272 = scalar_select %p271, %s22, 1
        %s273 = smul.addr %s272, 4
        %s274 = smul.addr %s273, 2
        %s275 = scalar_lea.vmem %s0, %s274
        %p276 = pneg %p43
        %p277 = pneg %p40
        %p278 = pneg %p64
        %p279 = pneg %p61
        %p280 = pneg %p85
        %p281 = pneg %p82
        %p282 = pneg %p106
        %p283 = pneg %p103
        %p284 = pneg %p127
        %p285 = pneg %p124
        %p286 = pneg %p148
        %p287 = pneg %p145
        %p288 = pneg %p169
        %p289 = pneg %p166
        %p290 = pneg %p190
        %p291 = pneg %p187
        %p292 = pneg %p216
        %p293 = pneg %p213
        %s294 = sand.u32 %s203, 1
        %s295 = scalar_lea.sflag [#allocation3], %s294
        %s296 = sand.u32 %s203, 1
        %s297 = smul.addr %s296, 24
        %s298 = scalar_lea.vmem [#allocation2], %s297
        %p299 = scmp.lt.s32.totalorder %s22, 1
        %s300 = scalar_select %p299, %s22, 1
        %s301 = smul.addr %s300, 4
        %s302 = smul.addr %s301, 2
        %s303 = scalar_lea.vmem %s0, %s302
        %v305 = vld [vmem:[%s303] sm:$0xff]
        %v306 = vld [vmem:[%s1] sm:$0x7]
        %v308 = vcombine.high %v305, %v305
        %v310 = vunpack.c.l.s4 1983009808
        %v311 = vunpack.c.0.s8 %v310
        %v312 = vlaneseq
        %v313 = vshrl.u32 %v312, 7
        %v314 = vsub.s32 %v311, %v313
        %v315 = vrot.slane %v305, %v314
        %v317 = vunpack.c.l.s4 1983009808
        %v318 = vunpack.c.0.s8 %v317
        %v319 = vlaneseq
        %v320 = vshrl.u32 %v319, 7
        %v321 = vsub.s32 %v318, %v320
        %v322 = vrot.slane %v308, %v321
        %v323 = vcombine.high %v315, %v315
        %v324 = vcombine.low %v305, %v305
        %v326 = vunpack.c.l.s4 1983009808
        %v327 = vunpack.c.0.s8 %v326
        %v328 = vlaneseq
        %v329 = vshrl.u32 %v328, 7
        %v330 = vsub.s32 %v327, %v329
        %v331 = vrot.slane %v324, %v330
        %v332 = vcombine.high %v331, %v331
        %333 = vrot.lane.b32.xlu0 %v331, 127
        %v334 = vpop.permute.xlu0 %333
        %335 = vrot.lane.b32.xlu0 %v332, 127
        %v336 = vpop.permute.xlu0 %335
        %337 = vrot.lane.b32.xlu0 %v315, 127
        %v338 = vpop.permute.xlu0 %337
        %339 = vrot.lane.b32.xlu0 %v323, 127
        %v340 = vpop.permute.xlu0 %339
        %vm341 = vcmask 1039360
        %v342 = vsel %vm341, %v334, %v336
        %v343 = vsel %vm341, %v336, %v338
        %v344 = vsel %vm341, %v338, %v340
        %v345 = vcombine.low %v315, %v315
        %v346 = vcombine.low %v322, %v322
        %347 = vrot.lane.b32.xlu0 %v345, 126
        %v348 = vpop.permute.xlu0 %347
        %349 = vrot.lane.b32.xlu0 %v315, 126
        %v350 = vpop.permute.xlu0 %349
        %351 = vrot.lane.b32.xlu0 %v346, 126
        %v352 = vpop.permute.xlu0 %351
        %353 = vrot.lane.b32.xlu0 %v322, 126
        %v354 = vpop.permute.xlu0 %353
        %vm355 = vcmask 1031168
        %v356 = vsel %vm355, %v348, %v350
        %v357 = vsel %vm355, %v350, %v352
        %v358 = vsel %vm355, %v352, %v354
        %v359 = vcombine.low %v331, %v331
        %360 = vrot.lane.b32.xlu0 %v359, 110
        %v361 = vpop.permute.xlu0 %360
        %362 = vrot.lane.b32.xlu0 %v331, 110
        %v363 = vpop.permute.xlu0 %362
        %364 = vrot.lane.b32.xlu0 %v345, 110
        %v365 = vpop.permute.xlu0 %364
        %366 = vrot.lane.b32.xlu0 %v315, 110
        %v367 = vpop.permute.xlu0 %366
        %vm368 = vcmask 900096
        %v369 = vsel %vm368, %v361, %v363
        %v370 = vsel %vm368, %v363, %v365
        %v371 = vsel %vm368, %v365, %v367
        %v372 = vcombine.high %v322, %v322
        %373 = vrot.lane.b32.xlu0 %v315, 109
        %v374 = vpop.permute.xlu0 %373
        %375 = vrot.lane.b32.xlu0 %v323, 109
        %v376 = vpop.permute.xlu0 %375
        %377 = vrot.lane.b32.xlu0 %v322, 109
        %v378 = vpop.permute.xlu0 %377
        %379 = vrot.lane.b32.xlu0 %v372, 109
        %v380 = vpop.permute.xlu0 %379
        %vm381 = vcmask 891904
        %v382 = vsel %vm381, %v374, %v376
        %v383 = vsel %vm381, %v376, %v378
        %v384 = vsel %vm381, %v378, %v380
        %385 = vrot.lane.b32.xlu0 %v331, 108
        %v386 = vpop.permute.xlu0 %385
        %387 = vrot.lane.b32.xlu0 %v332, 108
        %v388 = vpop.permute.xlu0 %387
        %389 = vrot.lane.b32.xlu0 %v315, 108
        %v390 = vpop.permute.xlu0 %389
        %391 = vrot.lane.b32.xlu0 %v323, 108
        %v392 = vpop.permute.xlu0 %391
        %vm393 = vcmask 883712
        %v394 = vsel %vm393, %v386, %v388
        %v395 = vsel %vm393, %v388, %v390
        %v396 = vsel %vm393, %v390, %v392
        %397 = vrot.lane.b32.xlu0 %v345, 92
        %v398 = vpop.permute.xlu0 %397
        %399 = vrot.lane.b32.xlu0 %v315, 92
        %v400 = vpop.permute.xlu0 %399
        %401 = vrot.lane.b32.xlu0 %v346, 92
        %v402 = vpop.permute.xlu0 %401
        %403 = vrot.lane.b32.xlu0 %v322, 92
        %v404 = vpop.permute.xlu0 %403
        %vm405 = vcmask 752640
        %v406 = vsel %vm405, %v398, %v400
        %v407 = vsel %vm405, %v400, %v402
        %v408 = vsel %vm405, %v402, %v404
        %409 = vrot.lane.b32.xlu0 %v359, 91
        %v410 = vpop.permute.xlu0 %409
        %411 = vrot.lane.b32.xlu0 %v331, 91
        %v412 = vpop.permute.xlu0 %411
        %413 = vrot.lane.b32.xlu0 %v345, 91
        %v414 = vpop.permute.xlu0 %413
        %415 = vrot.lane.b32.xlu0 %v315, 91
        %v416 = vpop.permute.xlu0 %415
        %vm417 = vcmask 744448
        %v418 = vsel %vm417, %v410, %v412
        %v419 = vsel %vm417, %v412, %v414
        %v420 = vsel %vm417, %v414, %v416
        %421 = vrot.lane.b32.xlu0 %v315, 90
        %v422 = vpop.permute.xlu0 %421
        %423 = vrot.lane.b32.xlu0 %v323, 90
        %v424 = vpop.permute.xlu0 %423
        %425 = vrot.lane.b32.xlu0 %v322, 90
        %v426 = vpop.permute.xlu0 %425
        %427 = vrot.lane.b32.xlu0 %v372, 90
        %v428 = vpop.permute.xlu0 %427
        %vm429 = vcmask 736256
        %v430 = vsel %vm429, %v422, %v424
        %v431 = vsel %vm429, %v424, %v426
        %v432 = vsel %vm429, %v426, %v428
        %vm433 = vcmask 1041408
        %v436 = vsel %vm433, %v315, %v342
        %v439 = vsel %vm433, %v323, %v343
        %v442 = vsel %vm433, %v322, %v344
        %vm443 = vcmask 1043456
        %v445 = vsel %vm443, %v436, %v356
        %v447 = vsel %vm443, %v439, %v357
        %v449 = vsel %vm443, %v442, %v358
        %vm450 = vcmask 1045504
        %v452 = vsel %vm450, %v445, %v369
        %v455 = vsel %vm450, %v447, %v370
        %v458 = vsel %vm450, %v449, %v371
        %v462 = vsel %vm433, %v382, %v394
        %v465 = vsel %vm433, %v383, %v395
        %v468 = vsel %vm433, %v384, %v396
        %v470 = vsel %vm443, %v462, %v406
        %v472 = vsel %vm443, %v465, %v407
        %v474 = vsel %vm443, %v468, %v408
        %v476 = vsel %vm450, %v470, %v418
        %v479 = vsel %vm450, %v472, %v419
        %v482 = vsel %vm450, %v474, %v420
        %v484 = vld [vmem:[%s2] sm:$0xf]
        %v485 = vld [vmem:[%s3] sm:$0xff]
        %487 = vset.pattern.permute.xlu0 0
        %488 = vperm.xlu0 %487, %v485
        %v489 = vpop.permute.xlu0 %488
        %vm491 = vcmask 293888
        %v493 = vsel %vm491, %v484, 0
        %v496 = vsel %vm433, %v430, 0
        %v499 = vsel %vm433, %v431, 0
        %v502 = vsel %vm433, %v432, 0
        %504 = vmatprep.subr.bf16.mxu0 %v455
        %505 = vmatpush1.bf16.msra.mxu0 %v452
        %506 = vmatprep.subr.bf16.mxu0 %v479
        %507 = vmatpush1.bf16.msra.mxu0 %v476
        %508 = vmatprep.subr.bf16.mxu0 %v499
        %509 = vmatpush1.bf16.msra.mxu0 %v496
        %510 = vmatprep.subr.bf16.mxu0 0
        %511 = vmatpush1.bf16.msra.mxu0 0
        %512 = vmatprep.subr.bf16.mxu0 0
        %513 = vmatpush1.bf16.msra.mxu0 0
        %514 = vmatprep.subr.bf16.mxu0 0
        %515 = vmatpush1.bf16.msra.mxu0 0
        %516 = vmatprep.subr.bf16.mxu0 0
        %517 = vmatpush1.bf16.msra.mxu0 0
        %518 = vmatprep.subr.bf16.mxu0 0
        %519 = vmatpush1.bf16.msra.mxu0 0
        %520 = vmatprep.subr.bf16.mxu0 0
        %521 = vmatpush1.bf16.msra.mxu0 0
        %522 = vmatprep.subr.bf16.mxu0 0
        %523 = vmatpush1.bf16.msra.mxu0 0
        %524 = vmatprep.subr.bf16.mxu0 0
        %525 = vmatpush1.bf16.msra.mxu0 0
        %526 = vmatprep.subr.bf16.mxu0 0
        %527 = vmatpush1.bf16.msra.mxu0 0
        %528 = vmatprep.subr.bf16.mxu0 0
        %529 = vmatpush1.bf16.msra.mxu0 0
        %530 = vmatprep.subr.bf16.mxu0 0
        %531 = vmatpush1.bf16.msra.mxu0 0
        %532 = vmatprep.subr.bf16.mxu0 0
        %533 = vmatpush1.bf16.msra.mxu0 0
        %534 = vmatprep.subr.bf16.mxu0 0
        %535 = vmatpush1.bf16.msra.mxu0 0
        %536 = vmatprep.mubr.bf16.mxu0 0
        %537 = vmatmul.mubr.bf16.gmra.mrb[0].mxu0 %v493
        %v538 = vpop.f32.mrb[0].mxu0
        %v539 = vadd.f32 %v489, %v538
        %v540 = vpop.f32.mrb[0].mxu0
        %v541 = vadd.f32 %v489, %v540
        %v542 = vpop.f32.mrb[0].mxu0
        %v543 = vpop.f32.mrb[0].mxu0
        %544 = vdwg.mxu0
        %545 = vmatprep.subr.bf16.mxu0 0
        %546 = vmatpush1.bf16.msra.mxu0 %v458
        %547 = vmatprep.subr.bf16.mxu0 0
        %548 = vmatpush1.bf16.msra.mxu0 %v482
        %549 = vmatprep.subr.bf16.mxu0 0
        %550 = vmatpush1.bf16.msra.mxu0 %v502
        %551 = vmatprep.subr.bf16.mxu0 0
        %552 = vmatpush1.bf16.msra.mxu0 0
        %553 = vmatprep.subr.bf16.mxu0 0
        %554 = vmatpush1.bf16.msra.mxu0 0
        %555 = vmatprep.subr.bf16.mxu0 0
        %556 = vmatpush1.bf16.msra.mxu0 0
        %557 = vmatprep.subr.bf16.mxu0 0
        %558 = vmatpush1.bf16.msra.mxu0 0
        %559 = vmatprep.subr.bf16.mxu0 0
        %560 = vmatpush1.bf16.msra.mxu0 0
        %561 = vmatprep.subr.bf16.mxu0 0
        %562 = vmatpush1.bf16.msra.mxu0 0
        %563 = vmatprep.subr.bf16.mxu0 0
        %564 = vmatpush1.bf16.msra.mxu0 0
        %565 = vmatprep.subr.bf16.mxu0 0
        %566 = vmatpush1.bf16.msra.mxu0 0
        %567 = vmatprep.subr.bf16.mxu0 0
        %568 = vmatpush1.bf16.msra.mxu0 0
        %569 = vmatprep.subr.bf16.mxu0 0
        %570 = vmatpush1.bf16.msra.mxu0 0
        %571 = vmatprep.subr.bf16.mxu0 0
        %572 = vmatpush1.bf16.msra.mxu0 0
        %573 = vmatprep.subr.bf16.mxu0 0
        %574 = vmatpush1.bf16.msra.mxu0 0
        %575 = vmatprep.subr.bf16.mxu0 0
        %576 = vmatpush1.bf16.msra.mxu0 0
        %577 = vmatprep.mubr.bf16.mxu0 0
        %578 = vmatmul.mubr.bf16.gmra.mrb[0].mxu0 %v493
        %v579 = vpop.f32.mrb[0].mxu0
        %v580 = vadd.f32 %v489, %v579
        %v581 = vpop.f32.mrb[0].mxu0
        %v582 = vpop.f32.mrb[0].mxu0
        %v583 = vpop.f32.mrb[0].mxu0
        %584 = vdwg.mxu0
        %vm585 = vcmp.gt.f32.partialorder %v539, 0.0
        %vm586 = vcmp.gt.f32.partialorder %v541, 0.0
        %vm587 = vcmp.gt.f32.partialorder %v580, 0.0
        %v588 = vld [vmem:[%s4] sm:$0xff]
        %590 = vset.pattern.permute.xlu0 0
        %591 = vperm.xlu0 %590, %v588
        %v592 = vpop.permute.xlu0 %591
        %v594 = vmul.f32 %v592, %v539
        %v595 = vmul.f32 %v592, %v541
        %v596 = vmul.f32 %v592, %v580
        %v597 = vsel %vm585, %v539, %v594
        %v598 = vsel %vm586, %v541, %v595
        %v599 = vsel %vm587, %v580, %v596
        %v601 = vlaneseq
        %v602 = vshrl.u32 %v601, 7
        %v603 = vsub.s32 0, %v602
        %v604 = vrot.slane %v306, %v603
        %v605 = vlaneseq
        %v606 = vshrl.u32 %v605, 7
        %v607 = vsub.s32 1, %v606
        %v608 = vrot.slane %v306, %v607
        %v609 = vlaneseq
        %v610 = vshrl.u32 %v609, 7
        %v611 = vsub.s32 2, %v610
        %v612 = vrot.slane %v306, %v611
        %v616 = vmul.f32 %v597, %v604
        %v617 = vmul.f32 %v598, %v608
        %v618 = vmul.f32 %v599, %v612
        %v619 = vpack.c.bf16 %v616, %v616
        %v620 = vpack.c.bf16 %v617, %v617
        %v621 = vpack.c.bf16 %v618, %v618
        %625 = vrot.lane.b32.xlu0 %v619, 19
        %v626 = vpop.permute.xlu0 %625
        %627 = vrot.lane.b32.xlu0 %v620, 19
        %v628 = vpop.permute.xlu0 %627
        %629 = vrot.lane.b32.xlu0 %v621, 19
        %v630 = vpop.permute.xlu0 %629
        %vm631 = vcmask 154624
        %v632 = vsel %vm631, %v626, %v628
        %v633 = vsel %vm631, %v628, %v630
        %vm634 = vcmask 154624
        %v637 = vsel %vm634, 0, %v626
        %v639 = vsel %vm634, %v630, 0
        %v642 = vrot.slane %v637, 4
        %v643 = vrot.slane %v632, 4
        %v644 = vrot.slane %v633, 4
        %v645 = vrot.slane %v639, 4
        %646 = vrot.lane.b32.xlu0 %v642, 127
        %v647 = vpop.permute.xlu0 %646
        %648 = vrot.lane.b32.xlu0 %v643, 127
        %v649 = vpop.permute.xlu0 %648
        %650 = vrot.lane.b32.xlu0 %v644, 127
        %v651 = vpop.permute.xlu0 %650
        %652 = vrot.lane.b32.xlu0 %v645, 127
        %v653 = vpop.permute.xlu0 %652
        %v654 = vsel %vm341, %v647, %v649
        %v655 = vsel %vm341, %v649, %v651
        %v656 = vsel %vm341, %v651, %v653
        %657 = vrot.lane.b32.xlu0 %v637, 126
        %v658 = vpop.permute.xlu0 %657
        %659 = vrot.lane.b32.xlu0 %v632, 126
        %v660 = vpop.permute.xlu0 %659
        %661 = vrot.lane.b32.xlu0 %v633, 126
        %v662 = vpop.permute.xlu0 %661
        %663 = vrot.lane.b32.xlu0 %v639, 126
        %v664 = vpop.permute.xlu0 %663
        %v665 = vsel %vm355, %v658, %v660
        %v666 = vsel %vm355, %v660, %v662
        %v667 = vsel %vm355, %v662, %v664
        %668 = vrot.lane.b32.xlu0 %v642, 110
        %v669 = vpop.permute.xlu0 %668
        %670 = vrot.lane.b32.xlu0 %v643, 110
        %v671 = vpop.permute.xlu0 %670
        %672 = vrot.lane.b32.xlu0 %v644, 110
        %v673 = vpop.permute.xlu0 %672
        %674 = vrot.lane.b32.xlu0 %v645, 110
        %v675 = vpop.permute.xlu0 %674
        %v676 = vsel %vm368, %v669, %v671
        %v677 = vsel %vm368, %v671, %v673
        %v678 = vsel %vm368, %v673, %v675
        %679 = vrot.lane.b32.xlu0 %v637, 109
        %v680 = vpop.permute.xlu0 %679
        %681 = vrot.lane.b32.xlu0 %v632, 109
        %v682 = vpop.permute.xlu0 %681
        %683 = vrot.lane.b32.xlu0 %v633, 109
        %v684 = vpop.permute.xlu0 %683
        %685 = vrot.lane.b32.xlu0 %v639, 109
        %v686 = vpop.permute.xlu0 %685
        %v687 = vsel %vm381, %v680, %v682
        %v688 = vsel %vm381, %v682, %v684
        %v689 = vsel %vm381, %v684, %v686
        %690 = vrot.lane.b32.xlu0 %v642, 108
        %v691 = vpop.permute.xlu0 %690
        %692 = vrot.lane.b32.xlu0 %v643, 108
        %v693 = vpop.permute.xlu0 %692
        %694 = vrot.lane.b32.xlu0 %v644, 108
        %v695 = vpop.permute.xlu0 %694
        %696 = vrot.lane.b32.xlu0 %v645, 108
        %v697 = vpop.permute.xlu0 %696
        %v698 = vsel %vm393, %v691, %v693
        %v699 = vsel %vm393, %v693, %v695
        %v700 = vsel %vm393, %v695, %v697
        %701 = vrot.lane.b32.xlu0 %v637, 92
        %v702 = vpop.permute.xlu0 %701
        %703 = vrot.lane.b32.xlu0 %v632, 92
        %v704 = vpop.permute.xlu0 %703
        %705 = vrot.lane.b32.xlu0 %v633, 92
        %v706 = vpop.permute.xlu0 %705
        %707 = vrot.lane.b32.xlu0 %v639, 92
        %v708 = vpop.permute.xlu0 %707
        %v709 = vsel %vm405, %v702, %v704
        %v710 = vsel %vm405, %v704, %v706
        %v711 = vsel %vm405, %v706, %v708
        %712 = vrot.lane.b32.xlu0 %v642, 91
        %v713 = vpop.permute.xlu0 %712
        %714 = vrot.lane.b32.xlu0 %v643, 91
        %v715 = vpop.permute.xlu0 %714
        %716 = vrot.lane.b32.xlu0 %v644, 91
        %v717 = vpop.permute.xlu0 %716
        %718 = vrot.lane.b32.xlu0 %v645, 91
        %v719 = vpop.permute.xlu0 %718
        %v720 = vsel %vm417, %v713, %v715
        %v721 = vsel %vm417, %v715, %v717
        %v722 = vsel %vm417, %v717, %v719
        %723 = vrot.lane.b32.xlu0 %v637, 90
        %v724 = vpop.permute.xlu0 %723
        %725 = vrot.lane.b32.xlu0 %v632, 90
        %v726 = vpop.permute.xlu0 %725
        %727 = vrot.lane.b32.xlu0 %v633, 90
        %v728 = vpop.permute.xlu0 %727
        %729 = vrot.lane.b32.xlu0 %v639, 90
        %v730 = vpop.permute.xlu0 %729
        %v731 = vsel %vm429, %v724, %v726
        %v732 = vsel %vm429, %v726, %v728
        %v733 = vsel %vm429, %v728, %v730
        %v735 = vsel %vm443, %v637, %v654
        %v739 = vsel %vm443, %v632, %v655
        %v743 = vsel %vm443, %v633, %v656
        %v747 = vsel %vm443, %v665, %v676
        %v751 = vsel %vm443, %v666, %v677
        %v755 = vsel %vm443, %v667, %v678
        %v759 = vsel %vm443, %v687, %v698
        %v763 = vsel %vm443, %v688, %v699
        %v767 = vsel %vm443, %v689, %v700
        %v771 = vsel %vm443, %v709, %v720
        %v775 = vsel %vm443, %v710, %v721
        %v779 = vsel %vm443, %v711, %v722
        %v781 = vld [vmem:[%s5] sm:$0xf]
        %v782 = vld [vmem:[%s6] sm:$0xff]
        %784 = vset.pattern.permute.xlu0 0
        %785 = vperm.xlu0 %784, %v782
        %v786 = vpop.permute.xlu0 %785
        %vm788 = vcmask 588800
        %v790 = vsel %vm788, %v781, 0
        %v793 = vsel %vm443, %v731, 0
        %v796 = vsel %vm443, %v732, 0
        %v799 = vsel %vm443, %v733, 0
        %801 = vmatprep.subr.bf16.mxu0 %v739
        %802 = vmatpush1.bf16.msra.mxu0 %v735
        %803 = vmatprep.subr.bf16.mxu0 %v751
        %804 = vmatpush1.bf16.msra.mxu0 %v747
        %805 = vmatprep.subr.bf16.mxu0 %v763
        %806 = vmatpush1.bf16.msra.mxu0 %v759
        %807 = vmatprep.subr.bf16.mxu0 %v775
        %808 = vmatpush1.bf16.msra.mxu0 %v771
        %809 = vmatprep.subr.bf16.mxu0 %v796
        %810 = vmatpush1.bf16.msra.mxu0 %v793
        %811 = vmatprep.subr.bf16.mxu0 0
        %812 = vmatpush1.bf16.msra.mxu0 0
        %813 = vmatprep.subr.bf16.mxu0 0
        %814 = vmatpush1.bf16.msra.mxu0 0
        %815 = vmatprep.subr.bf16.mxu0 0
        %816 = vmatpush1.bf16.msra.mxu0 0
        %817 = vmatprep.subr.bf16.mxu0 0
        %818 = vmatpush1.bf16.msra.mxu0 0
        %819 = vmatprep.subr.bf16.mxu0 0
        %820 = vmatpush1.bf16.msra.mxu0 0
        %821 = vmatprep.subr.bf16.mxu0 0
        %822 = vmatpush1.bf16.msra.mxu0 0
        %823 = vmatprep.subr.bf16.mxu0 0
        %824 = vmatpush1.bf16.msra.mxu0 0
        %825 = vmatprep.subr.bf16.mxu0 0
        %826 = vmatpush1.bf16.msra.mxu0 0
        %827 = vmatprep.subr.bf16.mxu0 0
        %828 = vmatpush1.bf16.msra.mxu0 0
        %829 = vmatprep.subr.bf16.mxu0 0
        %830 = vmatpush1.bf16.msra.mxu0 0
        %831 = vmatprep.subr.bf16.mxu0 0
        %832 = vmatpush1.bf16.msra.mxu0 0
        %833 = vmatprep.mubr.bf16.mxu0 0
        %834 = vmatmul.mubr.bf16.gmra.mrb[0].mxu0 %v790
        %v835 = vpop.f32.mrb[0].mxu0
        %v836 = vadd.f32 %v786, %v835
        %v837 = vpop.f32.mrb[0].mxu0
        %v838 = vadd.f32 %v786, %v837
        %v839 = vpop.f32.mrb[0].mxu0
        %v840 = vpop.f32.mrb[0].mxu0
        %841 = vdwg.mxu0
        %842 = vmatprep.subr.bf16.mxu0 0
        %843 = vmatpush1.bf16.msra.mxu0 %v743
        %844 = vmatprep.subr.bf16.mxu0 0
        %845 = vmatpush1.bf16.msra.mxu0 %v755
        %846 = vmatprep.subr.bf16.mxu0 0
        %847 = vmatpush1.bf16.msra.mxu0 %v767
        %848 = vmatprep.subr.bf16.mxu0 0
        %849 = vmatpush1.bf16.msra.mxu0 %v779
        %850 = vmatprep.subr.bf16.mxu0 0
        %851 = vmatpush1.bf16.msra.mxu0 %v799
        %852 = vmatprep.subr.bf16.mxu0 0
        %853 = vmatpush1.bf16.msra.mxu0 0
        %854 = vmatprep.subr.bf16.mxu0 0
        %855 = vmatpush1.bf16.msra.mxu0 0
        %856 = vmatprep.subr.bf16.mxu0 0
        %857 = vmatpush1.bf16.msra.mxu0 0
        %858 = vmatprep.subr.bf16.mxu0 0
        %859 = vmatpush1.bf16.msra.mxu0 0
        %860 = vmatprep.subr.bf16.mxu0 0
        %861 = vmatpush1.bf16.msra.mxu0 0
        %862 = vmatprep.subr.bf16.mxu0 0
        %863 = vmatpush1.bf16.msra.mxu0 0
        %864 = vmatprep.subr.bf16.mxu0 0
        %865 = vmatpush1.bf16.msra.mxu0 0
        %866 = vmatprep.subr.bf16.mxu0 0
        %867 = vmatpush1.bf16.msra.mxu0 0
        %868 = vmatprep.subr.bf16.mxu0 0
        %869 = vmatpush1.bf16.msra.mxu0 0
        %870 = vmatprep.subr.bf16.mxu0 0
        %871 = vmatpush1.bf16.msra.mxu0 0
        %872 = vmatprep.subr.bf16.mxu0 0
        %873 = vmatpush1.bf16.msra.mxu0 0
        %874 = vmatprep.mubr.bf16.mxu0 0
        %875 = vmatmul.mubr.bf16.gmra.mrb[0].mxu0 %v790
        %v876 = vpop.f32.mrb[0].mxu0
        %v877 = vadd.f32 %v786, %v876
        %v878 = vpop.f32.mrb[0].mxu0
        %v879 = vpop.f32.mrb[0].mxu0
        %v880 = vpop.f32.mrb[0].mxu0
        %881 = vdwg.mxu0
        %vm882 = vcmp.gt.f32.partialorder %v836, 0.0
        %vm883 = vcmp.gt.f32.partialorder %v838, 0.0
        %vm884 = vcmp.gt.f32.partialorder %v877, 0.0
        %v885 = vld [vmem:[%s7] sm:$0xff]
        %887 = vset.pattern.permute.xlu0 0
        %888 = vperm.xlu0 %887, %v885
        %v889 = vpop.permute.xlu0 %888
        %v891 = vmul.f32 %v889, %v836
        %v892 = vmul.f32 %v889, %v838
        %v893 = vmul.f32 %v889, %v877
        %v894 = vsel %vm882, %v836, %v891
        %v895 = vsel %vm883, %v838, %v892
        %v896 = vsel %vm884, %v877, %v893
        %897 = vst [vmem:[%s298] sm:$0xff] %v894
        %898 = vst [vmem:[%s298 + $0x8] sm:$0xff] %v895
        %899 = vst [vmem:[%s298 + $0x10] sm:$0xff] %v896
        %s900 = sand.u32 %s203, 1
        %s901 = scalar_lea.sflag [#allocation3], %s900
        %s902 = sand.u32 %s203, 1
        %s903 = smul.addr %s902, 24
        %s904 = scalar_lea.vmem [#allocation2], %s903
        // Predicated region
        $region53: #{tpu_custom_call.1} parent=51 // pred_check
          %p905 = pneg %p213
        $region54: #{tpu_custom_call.1} parent=51 // pred_check_branch
          %907 = sbr.rel (%p905) target = $region56
        $region55: #{tpu_custom_call.1} parent=51 // pred_region
          %s909 = ssub.s32 384, 384
          %910 = vsyncadd %s901, %s909
          %s911 = smul.addr %s22, 3
          %s912 = smul.addr %s911, 128
          %s913 = scalar_lea.hbm %s8, %s912
          %s915 = sshll.u32 %s904, 4
          %s916 = int_to_ptr.vmem [resolvable:$true] %s915
          %918 = dma.vmem_to_hbm [thread:$0]  %s916, 384, %s913, %s901
        $region56: #{tpu_custom_call.1} parent=51 // pred_fallthru
          _
      $region52: #{tpu_custom_call.1} parent=5 // pred_fallthru
        _
      %p919 = scmp.le.s32.totalorder 2, %s17
      // Predicated region
      $region57: #{tpu_custom_call.1} parent=5 // pred_check
        %p920 = pneg %p919
      $region58: #{tpu_custom_call.1} parent=5 // pred_check_branch
        %922 = sbr.rel (%p920) target = $region60
      $region59: #{tpu_custom_call.1} parent=5 // pred_region
        %s923 = ssub.s32 %s17, 2
        // Predicated region
        $region61: #{tpu_custom_call.1} parent=59 // pred_check
          %p924 = pneg %p219
        $region62: #{tpu_custom_call.1} parent=59 // pred_check_branch
          %926 = sbr.rel (%p924) target = $region64
        $region63: #{tpu_custom_call.1} parent=59 // pred_region
          %s927 = sand.u32 %s204, 1
          %s928 = scalar_lea.sflag [#allocation3], %s927
          %s929 = sand.u32 %s204, 1
          %s930 = smul.addr %s929, 24
          %s931 = scalar_lea.vmem [#allocation2], %s930
          %932 = dma.done %s928, 384
        $region64: #{tpu_custom_call.1} parent=59 // pred_fallthru
          _
      $region60: #{tpu_custom_call.1} parent=5 // pred_fallthru
        _
    $region6: #{tpu_custom_call.1} parent=1 // loop_footer
      %s21 = sadd.s32 1, %s17
    $region7: #{tpu_custom_call.1} parent=1 // loop_footer_branch
      %16 = sbr.rel target = $region3
    $region8: #{tpu_custom_call.1} parent=1 // loop_exit
      _
    %933 = vsyncpa [#allocation3], 1
    %s934 = scalar_lea.sflag [#allocation3], 1
    %935 = vsyncpa %s934, 1

</llo_original>
